<compile_context>
chip_gen: v5e
topology: v5e:2x2
jax: 0.10.0
libtpu: 0.0.40
codegen_flags: <defaults>
</compile_context>

<pallas_src>
import functools

import jax
import jax.numpy as jnp
from jax.experimental import pallas as pl
from jax.experimental.pallas import tpu as pltpu

IN_F = 4      # fc1 in_features
HID_F = 10    # fc1 out_features / fc2 in_features
OUT_F = 3     # fc2 out_features

GROUP = 32                    # samples packed per dense super-row
DENSE_IN = GROUP * IN_F       # 128
DENSE_HID = GROUP * HID_F     # 320
DENSE_OUT = GROUP * OUT_F     # 96


def net_kernel(x_ref, w1_ref, w2_ref, b_ref, o_ref):
    x = x_ref[...]                                       # (TB, 128) f32

    b1 = b_ref[0:1, :]                                   # (1, 320)
    b2 = b_ref[1:2, 0:DENSE_OUT]                         # (1, 96)

    # fc1 + relu: block-diagonal weights = 32 independent 4->10 GEMVs, K=128
    h = jnp.dot(x, w1_ref[...], preferred_element_type=jnp.float32) + b1
    h = jnp.maximum(h, 0.0)                              # (TB, 320)

    # fc2, class-major layout: z[:, c*32+g] = logit of class c for sample g
    z = jnp.dot(h, w2_ref[...], preferred_element_type=jnp.float32) + b2  # (TB, 96)

    # Softmax over the 3 classes of each sample = elementwise math over three
    # aligned 32-lane slices; exact divide so rows sum to 1 exactly (f32 ULPs).
    z0 = z[:, 0 * GROUP:1 * GROUP]
    z1 = z[:, 1 * GROUP:2 * GROUP]
    z2 = z[:, 2 * GROUP:3 * GROUP]
    m = jnp.maximum(jnp.maximum(z0, z1), z2)             # per-sample max (stable)
    e0 = jnp.exp(z0 - m)
    e1 = jnp.exp(z1 - m)
    e2 = jnp.exp(z2 - m)
    inv = 1.0 / (e0 + e1 + e2)                           # exact divide
    o_ref[...] = jnp.concatenate([e0 * inv, e1 * inv, e2 * inv], axis=1)


def pack_params(w1, b1, w2, b2):
    """Pack small-net params into lane-dense block-diagonal slabs.

    w1: (4, 10), b1: (10,), w2: (10, 3), b2: (3,)  (weights stored (in, out)).
    Returns:
      w1_blk: (128, 320)  block diagonal, 32 copies of w1
      w2_blk: (320, 96)   32 copies of w2 with CLASS-major output columns
      bias:   (2, 320)    row 0 = tiled b1, row 1[:96] = class-major b2
    """
    w1 = w1.astype(jnp.float32)
    w2 = w2.astype(jnp.float32)
    eye = jnp.eye(GROUP, dtype=jnp.float32)

    w1_blk = jnp.kron(eye, w1)                                        # (128, 320)

    # w2_blk[g*10+k, c*32+g'] = w2[k, c] * (g == g')
    t = w2[None, :, :, None] * eye[:, None, None, :]                  # (32,10,3,32)
    w2_blk = t.reshape(DENSE_HID, DENSE_OUT)                          # (320, 96)

    bias = jnp.zeros((2, DENSE_HID), jnp.float32)
    bias = bias.at[0, :].set(jnp.tile(b1.astype(jnp.float32), GROUP))          # (320,)
    bias = bias.at[1, :DENSE_OUT].set(jnp.repeat(b2.astype(jnp.float32), GROUP))
    return w1_blk, w2_blk, bias


@functools.partial(jax.jit, static_argnames=("block_rows",))
def net_forward(x, w1_blk, w2_blk, bias, block_rows=1024):
    """x: (B, 4) f32 -> (B, 3) softmax probabilities."""
    B = x.shape[0]
    md_min = pl.cdiv(B, GROUP)                       # dense super-rows needed
    tb = min(block_rows, ((md_min + 7) // 8) * 8)    # sublane-aligned batch tile
    steps = pl.cdiv(md_min, tb)
    md = steps * tb                                  # padded dense rows
    bp = md * GROUP                                  # padded batch
    if bp != B:
        x = jnp.pad(x, ((0, bp - B), (0, 0)))
    x_dense = x.reshape(md, DENSE_IN)                # free contiguous reshape

    cost = pl.CostEstimate(
        flops=2 * md * (DENSE_IN * DENSE_HID + DENSE_HID * DENSE_OUT),
        transcendentals=3 * bp,
        bytes_accessed=4 * (md * (DENSE_IN + DENSE_OUT)
                            + DENSE_IN * DENSE_HID + DENSE_HID * DENSE_OUT
                            + 2 * DENSE_HID),
    )

    out_dense = pl.pallas_call(
        net_kernel,
        out_shape=jax.ShapeDtypeStruct((md, DENSE_OUT), jnp.float32),
        grid_spec=pltpu.PrefetchScalarGridSpec(
            num_scalar_prefetch=0,
            grid=(steps,),
            in_specs=[
                pl.BlockSpec((tb, DENSE_IN), lambda i: (i, 0)),          # x tile
                pl.BlockSpec((DENSE_IN, DENSE_HID), lambda i: (0, 0)),   # w1 (resident)
                pl.BlockSpec((DENSE_HID, DENSE_OUT), lambda i: (0, 0)),  # w2 (resident)
                pl.BlockSpec((2, DENSE_HID), lambda i: (0, 0)),          # biases (resident)
            ],
            out_specs=pl.BlockSpec((tb, DENSE_OUT), lambda i: (i, 0)),
        ),
        compiler_params=pltpu.CompilerParams(
            dimension_semantics=("parallel",),        # megacore sharding on v7x
        ),
        cost_estimate=cost,
    )(x_dense, w1_blk, w2_blk, bias)

    # class-major (md, 96) -> (bp, 3) -> drop padding rows
    out = out_dense.reshape(md, OUT_F, GROUP).transpose(0, 2, 1).reshape(bp, OUT_F)
    return out[:B]


def init_params(key):
    """Deterministic init matching nn.Linear's U(-1/sqrt(fan_in), 1/sqrt(fan_in)).

    Weights are stored pre-transposed as (in_features, out_features).
    """
    k1, k2, k3, k4 = jax.random.split(key, 4)
    bound1 = 1.0 / jnp.sqrt(float(IN_F))
    bound2 = 1.0 / jnp.sqrt(float(HID_F))
    w1 = jax.random.uniform(k1, (IN_F, HID_F), jnp.float32, -bound1, bound1)
    b1 = jax.random.uniform(k2, (HID_F,), jnp.float32, -bound1, bound1)
    w2 = jax.random.uniform(k3, (HID_F, OUT_F), jnp.float32, -bound2, bound2)
    b2 = jax.random.uniform(k4, (OUT_F,), jnp.float32, -bound2, bound2)
    return w1, b1, w2, b2


if __name__ == "__main__":
    key = jax.random.PRNGKey(0)
    k_p, k_small, k_large = jax.random.split(key, 3)

    w1, b1, w2, b2 = init_params(k_p)
    w1_blk, w2_blk, bias = pack_params(w1, b1, w2, b2)

    def ref_forward(x):
        h = jnp.maximum(x @ w1 + b1, 0.0)
        return jax.nn.softmax(h @ w2 + b2, axis=1)

    # Small batch (module-scale example) + a larger ragged batch to exercise
    # the padding / lane-dense repacking path.
    for batch, kk in ((8, k_small), (1030, k_large)):
        x = jax.random.normal(kk, (batch, IN_F), dtype=jnp.float32)
        out = jax.block_until_ready(net_forward(x, w1_blk, w2_blk, bias))

        assert out.shape == (batch, OUT_F)
        assert bool(jnp.all(jnp.isfinite(out)))
        # exact divide in the kernel -> rows sum to 1 to f32 rounding
        assert jnp.allclose(jnp.sum(out, axis=1), 1.0, atol=1e-4)
        # matches the pure-JAX reference (tolerance covers MXU default precision)
        assert jnp.allclose(out, ref_forward(x), rtol=2e-3, atol=2e-3)

    print("KERNEL_OK")
</pallas_src>

<mosaic_0001>
module attributes {stable_mosaic.version = 11 : i64} {
  func.func @net_kernel(%arg0: i32, %arg1: memref<8x128xf32, #tpu.memory_space<vmem>>, %arg2: memref<128x320xf32, #tpu.memory_space<vmem>>, %arg3: memref<320x96xf32, #tpu.memory_space<vmem>>, %arg4: memref<2x320xf32, #tpu.memory_space<vmem>>, %arg5: memref<8x96xf32, #tpu.memory_space<vmem>>) attributes {dimension_semantics = [#tpu.dimension_semantics<parallel>], iteration_bounds = array<i64: 1>, scalar_prefetch = 0 : i64, scratch_operands = 0 : i64, tpu.core_type = #tpu.core_type<tc>, window_params = [{transform_indices = @transform_0, window_bounds = array<i64: 8, 128>}, {pipeline_mode = #tpu.pipeline_mode<synchronous>, transform_indices = @transform_1, window_bounds = array<i64: 128, 320>}, {pipeline_mode = #tpu.pipeline_mode<synchronous>, transform_indices = @transform_2, window_bounds = array<i64: 320, 96>}, {pipeline_mode = #tpu.pipeline_mode<synchronous>, transform_indices = @transform_3, window_bounds = array<i64: 2, 320>}, {transform_indices = @transform_4, window_bounds = array<i64: 8, 96>}]} {
    %c0 = arith.constant 0 : index
    %c0_0 = arith.constant 0 : index
    %0 = vector.load %arg1[%c0, %c0_0] : memref<8x128xf32, #tpu.memory_space<vmem>>, vector<8x128xf32>
    %c0_1 = arith.constant 0 : index
    %c0_2 = arith.constant 0 : index
    %1 = vector.load %arg4[%c0_1, %c0_2] : memref<2x320xf32, #tpu.memory_space<vmem>>, vector<1x320xf32>
    %c1 = arith.constant 1 : index
    %c0_3 = arith.constant 0 : index
    %2 = vector.load %arg4[%c1, %c0_3] : memref<2x320xf32, #tpu.memory_space<vmem>>, vector<1x96xf32>
    %c0_4 = arith.constant 0 : index
    %c0_5 = arith.constant 0 : index
    %3 = vector.load %arg2[%c0_4, %c0_5] : memref<128x320xf32, #tpu.memory_space<vmem>>, vector<128x320xf32>
    %cst = arith.constant dense<0.000000e+00> : vector<8x320xf32>
    %4 = tpu.matmul %0, %3, %cst {dimension_numbers = #tpu.dot_dimension_numbers<[1], [0], [0], [1], [0, 0, 1, 1], [], []>} : vector<8x128xf32>, vector<128x320xf32>, vector<8x320xf32> -> vector<8x320xf32>
    %5 = vector.broadcast %1 : vector<1x320xf32> to vector<8x320xf32>
    %6 = arith.addf %4, %5 : vector<8x320xf32>
    %cst_6 = arith.constant 0.000000e+00 : f32
    %7 = vector.broadcast %cst_6 : f32 to vector<8x320xf32>
    %8 = arith.maximumf %6, %7 : vector<8x320xf32>
    %c0_7 = arith.constant 0 : index
    %c0_8 = arith.constant 0 : index
    %9 = vector.load %arg3[%c0_7, %c0_8] : memref<320x96xf32, #tpu.memory_space<vmem>>, vector<320x96xf32>
    %cst_9 = arith.constant dense<0.000000e+00> : vector<8x96xf32>
    %10 = tpu.matmul %8, %9, %cst_9 {dimension_numbers = #tpu.dot_dimension_numbers<[1], [0], [0], [1], [0, 0, 1, 1], [], []>} : vector<8x320xf32>, vector<320x96xf32>, vector<8x96xf32> -> vector<8x96xf32>
    %11 = vector.broadcast %2 : vector<1x96xf32> to vector<8x96xf32>
    %12 = arith.addf %10, %11 : vector<8x96xf32>
    %13 = vector.extract_strided_slice %12 {offsets = [0, 0], sizes = [8, 32], strides = [1, 1]} : vector<8x96xf32> to vector<8x32xf32>
    %14 = vector.extract_strided_slice %12 {offsets = [0, 32], sizes = [8, 32], strides = [1, 1]} : vector<8x96xf32> to vector<8x32xf32>
    %15 = vector.extract_strided_slice %12 {offsets = [0, 64], sizes = [8, 32], strides = [1, 1]} : vector<8x96xf32> to vector<8x32xf32>
    %16 = arith.maximumf %13, %14 : vector<8x32xf32>
    %17 = arith.maximumf %16, %15 : vector<8x32xf32>
    %18 = arith.subf %13, %17 : vector<8x32xf32>
    %19 = math.exp %18 : vector<8x32xf32>
    %20 = arith.subf %14, %17 : vector<8x32xf32>
    %21 = math.exp %20 : vector<8x32xf32>
    %22 = arith.subf %15, %17 : vector<8x32xf32>
    %23 = math.exp %22 : vector<8x32xf32>
    %24 = arith.addf %19, %21 : vector<8x32xf32>
    %25 = arith.addf %24, %23 : vector<8x32xf32>
    %cst_10 = arith.constant 1.000000e+00 : f32
    %26 = vector.broadcast %cst_10 : f32 to vector<8x32xf32>
    %27 = arith.divf %26, %25 : vector<8x32xf32>
    %28 = arith.mulf %19, %27 : vector<8x32xf32>
    %29 = arith.mulf %21, %27 : vector<8x32xf32>
    %30 = arith.mulf %23, %27 : vector<8x32xf32>
    %31 = tpu.concatenate %28, %29, %30 in 1 : vector<8x32xf32>, vector<8x32xf32>, vector<8x32xf32> -> vector<8x96xf32>
    %c0_11 = arith.constant 0 : index
    %c0_12 = arith.constant 0 : index
    %32 = vector.load %arg5[%c0_11, %c0_12] : memref<8x96xf32, #tpu.memory_space<vmem>>, vector<8x96xf32>
    tpu.vector_store %arg5[%c0_11, %c0_12], %31 {strides = array<i32>} : memref<8x96xf32, #tpu.memory_space<vmem>>, vector<8x96xf32>,
    return
  }
  func.func @transform_0(%arg0: i32) -> (i32, i32) {
    %c0_i32 = arith.constant 0 : i32
    %c0_i32_0 = arith.constant 0 : i32
    return %arg0, %c0_i32 : i32, i32
  }
  func.func @transform_1(%arg0: i32) -> (i32, i32) {
    %c0_i32 = arith.constant 0 : i32
    %c0_i32_0 = arith.constant 0 : i32
    %c0_i32_1 = arith.constant 0 : i32
    return %c0_i32, %c0_i32_0 : i32, i32
  }
  func.func @transform_2(%arg0: i32) -> (i32, i32) {
    %c0_i32 = arith.constant 0 : i32
    %c0_i32_0 = arith.constant 0 : i32
    %c0_i32_1 = arith.constant 0 : i32
    return %c0_i32, %c0_i32_0 : i32, i32
  }
  func.func @transform_3(%arg0: i32) -> (i32, i32) {
    %c0_i32 = arith.constant 0 : i32
    %c0_i32_0 = arith.constant 0 : i32
    %c0_i32_1 = arith.constant 0 : i32
    return %c0_i32, %c0_i32_0 : i32, i32
  }
  func.func @transform_4(%arg0: i32) -> (i32, i32) {
    %c0_i32 = arith.constant 0 : i32
    %c0_i32_0 = arith.constant 0 : i32
    return %arg0, %c0_i32 : i32, i32
  }
}

</mosaic_0001>

<llo_original>
// kernel: net_forward.1
$region0: #{net_forward.1}
  #allocation0 [shape = 'u32[]', space=smem, size = 0x4, offset = 0x4, fixed_abs, tag = 'smem constant byte address 0x4 - core index']
  #allocation1 [shape = 'u32[72,128]{1,0:T(1,128)}', space=vmem, size = 0x9000, scoped, tag = 'internal scratch']
  %s0 = inlined_call_operand.vmem [shape: f32[8,128], index: 0, kind: input, shape index: {}]
  %s1 = inlined_call_operand.vmem [shape: f32[128,320], index: 1, kind: input, shape index: {}]
  %s2 = inlined_call_operand.vmem [shape: f32[320,96], index: 2, kind: input, shape index: {}]
  %s3 = inlined_call_operand.vmem [shape: f32[2,320], index: 3, kind: input, shape index: {}]
  %s4 = inlined_call_operand.vmem [shape: f32[8,96], index: 4, kind: output, shape index: {}]
  %s5 = sld [smem:[#allocation0]]
  $region26: #{net_forward.1} parent=0
    _
  %s7 = ssub.s32 1, %s5
  %s8 = scalar_select 0, %s7, %s5
  // Predicated region
  $region2: #{net_forward.1} parent=0 // pred_check
    _
  $region3: #{net_forward.1} parent=0 // pred_check_branch
    %10 = sbr.rel (0) target = $region5
  $region4: #{net_forward.1} parent=0 // pred_region
    _
  $region5: #{net_forward.1} parent=0 // pred_fallthru
    _
  // Predicated region
  $region6: #{net_forward.1} parent=0 // pred_check
    _
  $region7: #{net_forward.1} parent=0 // pred_check_branch
    %12 = sbr.rel (0) target = $region9
  $region8: #{net_forward.1} parent=0 // pred_region
    _
  $region9: #{net_forward.1} parent=0 // pred_fallthru
    _
  // Predicated region
  $region10: #{net_forward.1} parent=0 // pred_check
    _
  $region11: #{net_forward.1} parent=0 // pred_check_branch
    %14 = sbr.rel (0) target = $region13
  $region12: #{net_forward.1} parent=0 // pred_region
    _
  $region13: #{net_forward.1} parent=0 // pred_fallthru
    _
  // Predicated region
  $region14: #{net_forward.1} parent=0 // pred_check
    _
  $region15: #{net_forward.1} parent=0 // pred_check_branch
    %16 = sbr.rel (0) target = $region17
  $region16: #{net_forward.1} parent=0 // pred_region
    _
  $region17: #{net_forward.1} parent=0 // pred_fallthru
    _
  %v17 = vld [vmem:[%s0] sm:$0xff]
  %v18 = vld [vmem:[%s3] ss:$2 sm:$0x7]
  %v19 = vld [vmem:[%s3 + $0x1] sm:$0x1]
  %v20 = vld [vmem:[%s1] sm:$0xff]
  %v21 = vld [vmem:[%s1 + $0x8] sm:$0xff]
  %v22 = vld [vmem:[%s1 + $0x10] sm:$0xff]
  %v23 = vld [vmem:[%s1 + $0x18] sm:$0xff]
  %v24 = vld [vmem:[%s1 + $0x20] sm:$0xff]
  %v25 = vld [vmem:[%s1 + $0x28] sm:$0xff]
  %v26 = vld [vmem:[%s1 + $0x30] sm:$0xff]
  %v27 = vld [vmem:[%s1 + $0x38] sm:$0xff]
  %v28 = vld [vmem:[%s1 + $0x40] sm:$0xff]
  %v29 = vld [vmem:[%s1 + $0x48] sm:$0xff]
  %v30 = vld [vmem:[%s1 + $0x50] sm:$0xff]
  %v31 = vld [vmem:[%s1 + $0x58] sm:$0xff]
  %v32 = vld [vmem:[%s1 + $0x60] sm:$0xff]
  %v33 = vld [vmem:[%s1 + $0x68] sm:$0xff]
  %v34 = vld [vmem:[%s1 + $0x70] sm:$0xff]
  %v35 = vld [vmem:[%s1 + $0x78] sm:$0xff]
  %v36 = vld [vmem:[%s1 + $0x80] sm:$0xff]
  %v37 = vld [vmem:[%s1 + $0x88] sm:$0xff]
  %v38 = vld [vmem:[%s1 + $0x90] sm:$0xff]
  %v39 = vld [vmem:[%s1 + $0x98] sm:$0xff]
  %v40 = vld [vmem:[%s1 + $0xa0] sm:$0xff]
  %v41 = vld [vmem:[%s1 + $0xa8] sm:$0xff]
  %v42 = vld [vmem:[%s1 + $0xb0] sm:$0xff]
  %v43 = vld [vmem:[%s1 + $0xb8] sm:$0xff]
  %v44 = vld [vmem:[%s1 + $0xc0] sm:$0xff]
  %v45 = vld [vmem:[%s1 + $0xc8] sm:$0xff]
  %v46 = vld [vmem:[%s1 + $0xd0] sm:$0xff]
  %v47 = vld [vmem:[%s1 + $0xd8] sm:$0xff]
  %v48 = vld [vmem:[%s1 + $0xe0] sm:$0xff]
  %v49 = vld [vmem:[%s1 + $0xe8] sm:$0xff]
  %v50 = vld [vmem:[%s1 + $0xf0] sm:$0xff]
  %v51 = vld [vmem:[%s1 + $0xf8] sm:$0xff]
  %v52 = vld [vmem:[%s1 + $0x100] sm:$0xff]
  %v53 = vld [vmem:[%s1 + $0x108] sm:$0xff]
  %v54 = vld [vmem:[%s1 + $0x110] sm:$0xff]
  %v55 = vld [vmem:[%s1 + $0x118] sm:$0xff]
  %v56 = vld [vmem:[%s1 + $0x120] sm:$0xff]
  %v57 = vld [vmem:[%s1 + $0x128] sm:$0xff]
  %v58 = vld [vmem:[%s1 + $0x130] sm:$0xff]
  %v59 = vld [vmem:[%s1 + $0x138] sm:$0xff]
  %v60 = vld [vmem:[%s1 + $0x140] sm:$0xff]
  %v61 = vld [vmem:[%s1 + $0x148] sm:$0xff]
  %v62 = vld [vmem:[%s1 + $0x150] sm:$0xff]
  %v63 = vld [vmem:[%s1 + $0x158] sm:$0xff]
  %v64 = vld [vmem:[%s1 + $0x160] sm:$0xff]
  %v65 = vld [vmem:[%s1 + $0x168] sm:$0xff]
  %v66 = vld [vmem:[%s1 + $0x170] sm:$0xff]
  %v67 = vld [vmem:[%s1 + $0x178] sm:$0xff]
  %v69 = vperm.slane %v18, 0
  %v70 = vperm.slane %v18, 1
  %v71 = vperm.slane %v18, 2
  %75 = vmatpush.msra.mxu0 %v65
  %76 = vmatpush.msra.mxu0 %v62
  %77 = vmatpush.msra.mxu0 %v59
  %78 = vmatpush.msra.mxu0 %v56
  %79 = vmatpush.msra.mxu0 %v53
  %80 = vmatpush.msra.mxu0 %v50
  %81 = vmatpush.msra.mxu0 %v47
  %82 = vmatpush.msra.mxu0 %v44
  %83 = vmatpush.msra.mxu0 %v41
  %84 = vmatpush.msra.mxu0 %v38
  %85 = vmatpush.msra.mxu0 %v35
  %86 = vmatpush.msra.mxu0 %v32
  %87 = vmatpush.msra.mxu0 %v29
  %88 = vmatpush.msra.mxu0 %v26
  %89 = vmatpush.msra.mxu0 %v23
  %90 = vmatpush.msra.mxu0 %v20
  %91 = vmatmul.f32.gmra.mxu0 %v17
  %v92 = vpop.f32.mrf.mxu0
  %v93 = vadd.f32 %v69, %v92
  %94 = vdwg.mxu0
  %95 = vmatpush.msra.mxu0 %v66
  %96 = vmatpush.msra.mxu0 %v63
  %97 = vmatpush.msra.mxu0 %v60
  %98 = vmatpush.msra.mxu0 %v57
  %99 = vmatpush.msra.mxu0 %v54
  %100 = vmatpush.msra.mxu0 %v51
  %101 = vmatpush.msra.mxu0 %v48
  %102 = vmatpush.msra.mxu0 %v45
  %103 = vmatpush.msra.mxu0 %v42
  %104 = vmatpush.msra.mxu0 %v39
  %105 = vmatpush.msra.mxu0 %v36
  %106 = vmatpush.msra.mxu0 %v33
  %107 = vmatpush.msra.mxu0 %v30
  %108 = vmatpush.msra.mxu0 %v27
  %109 = vmatpush.msra.mxu0 %v24
  %110 = vmatpush.msra.mxu0 %v21
  %111 = vmatmul.f32.gmra.mxu0 %v17
  %v112 = vpop.f32.mrf.mxu0
  %v113 = vadd.f32 %v70, %v112
  %114 = vdwg.mxu0
  %115 = vmatpush.msra.mxu0 %v67
  %116 = vmatpush.msra.mxu0 %v64
  %117 = vmatpush.msra.mxu0 %v61
  %118 = vmatpush.msra.mxu0 %v58
  %119 = vmatpush.msra.mxu0 %v55
  %120 = vmatpush.msra.mxu0 %v52
  %121 = vmatpush.msra.mxu0 %v49
  %122 = vmatpush.msra.mxu0 %v46
  %123 = vmatpush.msra.mxu0 %v43
  %124 = vmatpush.msra.mxu0 %v40
  %125 = vmatpush.msra.mxu0 %v37
  %126 = vmatpush.msra.mxu0 %v34
  %127 = vmatpush.msra.mxu0 %v31
  %128 = vmatpush.msra.mxu0 %v28
  %129 = vmatpush.msra.mxu0 %v25
  %130 = vmatpush.msra.mxu0 %v22
  %131 = vmatmul.f32.gmra.mxu0 %v17
  %v132 = vpop.f32.mrf.mxu0
  %v133 = vadd.f32 %v71, %v132
  %134 = vdwg.mxu0
  %v135 = vmax.f32 %v93, 0.0
  %v136 = vmax.f32 %v113, 0.0
  %v137 = vmax.f32 %v133, 0.0
  %v138 = vld [vmem:[%s2] sm:$0xff]
  %v139 = vld [vmem:[%s2 + $0x8] sm:$0xff]
  %v140 = vld [vmem:[%s2 + $0x10] sm:$0xff]
  %v141 = vld [vmem:[%s2 + $0x18] sm:$0xff]
  %v142 = vld [vmem:[%s2 + $0x20] sm:$0xff]
  %v143 = vld [vmem:[%s2 + $0x28] sm:$0xff]
  %v144 = vld [vmem:[%s2 + $0x30] sm:$0xff]
  %v145 = vld [vmem:[%s2 + $0x38] sm:$0xff]
  %v146 = vld [vmem:[%s2 + $0x40] sm:$0xff]
  %v147 = vld [vmem:[%s2 + $0x48] sm:$0xff]
  %v148 = vld [vmem:[%s2 + $0x50] sm:$0xff]
  %v149 = vld [vmem:[%s2 + $0x58] sm:$0xff]
  %v150 = vld [vmem:[%s2 + $0x60] sm:$0xff]
  %v151 = vld [vmem:[%s2 + $0x68] sm:$0xff]
  %v152 = vld [vmem:[%s2 + $0x70] sm:$0xff]
  %v153 = vld [vmem:[%s2 + $0x78] sm:$0xff]
  %v154 = vld [vmem:[%s2 + $0x80] sm:$0xff]
  %v155 = vld [vmem:[%s2 + $0x88] sm:$0xff]
  %v156 = vld [vmem:[%s2 + $0x90] sm:$0xff]
  %v157 = vld [vmem:[%s2 + $0x98] sm:$0xff]
  %v158 = vld [vmem:[%s2 + $0xa0] sm:$0xff]
  %v159 = vld [vmem:[%s2 + $0xa8] sm:$0xff]
  %v160 = vld [vmem:[%s2 + $0xb0] sm:$0xff]
  %v161 = vld [vmem:[%s2 + $0xb8] sm:$0xff]
  %v162 = vld [vmem:[%s2 + $0xc0] sm:$0xff]
  %v163 = vld [vmem:[%s2 + $0xc8] sm:$0xff]
  %v164 = vld [vmem:[%s2 + $0xd0] sm:$0xff]
  %v165 = vld [vmem:[%s2 + $0xd8] sm:$0xff]
  %v166 = vld [vmem:[%s2 + $0xe0] sm:$0xff]
  %v167 = vld [vmem:[%s2 + $0xe8] sm:$0xff]
  %v168 = vld [vmem:[%s2 + $0xf0] sm:$0xff]
  %v169 = vld [vmem:[%s2 + $0xf8] sm:$0xff]
  %v170 = vld [vmem:[%s2 + $0x100] sm:$0xff]
  %v171 = vld [vmem:[%s2 + $0x108] sm:$0xff]
  %v172 = vld [vmem:[%s2 + $0x110] sm:$0xff]
  %v173 = vld [vmem:[%s2 + $0x118] sm:$0xff]
  %v174 = vld [vmem:[%s2 + $0x120] sm:$0xff]
  %v175 = vld [vmem:[%s2 + $0x128] sm:$0xff]
  %v176 = vld [vmem:[%s2 + $0x130] sm:$0xff]
  %v177 = vld [vmem:[%s2 + $0x138] sm:$0xff]
  %v178 = vperm.slane %v19, 0
  %vm179 = vcmask 523264
  %v181 = vsel %vm179, %v137, 0
  %183 = vmatpush.msra.mxu0 %v153
  %184 = vmatpush.msra.mxu0 %v152
  %185 = vmatpush.msra.mxu0 %v151
  %186 = vmatpush.msra.mxu0 %v150
  %187 = vmatpush.msra.mxu0 %v149
  %188 = vmatpush.msra.mxu0 %v148
  %189 = vmatpush.msra.mxu0 %v147
  %190 = vmatpush.msra.mxu0 %v146
  %191 = vmatpush.msra.mxu0 %v145
  %192 = vmatpush.msra.mxu0 %v144
  %193 = vmatpush.msra.mxu0 %v143
  %194 = vmatpush.msra.mxu0 %v142
  %195 = vmatpush.msra.mxu0 %v141
  %196 = vmatpush.msra.mxu0 %v140
  %197 = vmatpush.msra.mxu0 %v139
  %198 = vmatpush.msra.mxu0 %v138
  %199 = vmatmul.f32.gmra.mxu0 %v135
  %v200 = vpop.f32.mrf.mxu0
  %v201 = vadd.f32 %v178, %v200
  %202 = vdwg.mxu0
  %203 = vmatpush.msra.mxu0 %v169
  %204 = vmatpush.msra.mxu0 %v168
  %205 = vmatpush.msra.mxu0 %v167
  %206 = vmatpush.msra.mxu0 %v166
  %207 = vmatpush.msra.mxu0 %v165
  %208 = vmatpush.msra.mxu0 %v164
  %209 = vmatpush.msra.mxu0 %v163
  %210 = vmatpush.msra.mxu0 %v162
  %211 = vmatpush.msra.mxu0 %v161
  %212 = vmatpush.msra.mxu0 %v160
  %213 = vmatpush.msra.mxu0 %v159
  %214 = vmatpush.msra.mxu0 %v158
  %215 = vmatpush.msra.mxu0 %v157
  %216 = vmatpush.msra.mxu0 %v156
  %217 = vmatpush.msra.mxu0 %v155
  %218 = vmatpush.msra.mxu0 %v154
  %219 = vmatmul.f32.gmra.mxu0 %v136
  %v220 = vpop.f32.mrf.mxu0
  %v221 = vadd.f32 %v201, %v220
  %222 = vdwg.mxu0
  %223 = vmatpush.msra.mxu0 0.0
  %224 = vmatpush.msra.mxu0 0.0
  %225 = vmatpush.msra.mxu0 0.0
  %226 = vmatpush.msra.mxu0 0.0
  %227 = vmatpush.msra.mxu0 0.0
  %228 = vmatpush.msra.mxu0 0.0
  %229 = vmatpush.msra.mxu0 0.0
  %230 = vmatpush.msra.mxu0 0.0
  %231 = vmatpush.msra.mxu0 %v177
  %232 = vmatpush.msra.mxu0 %v176
  %233 = vmatpush.msra.mxu0 %v175
  %234 = vmatpush.msra.mxu0 %v174
  %235 = vmatpush.msra.mxu0 %v173
  %236 = vmatpush.msra.mxu0 %v172
  %237 = vmatpush.msra.mxu0 %v171
  %238 = vmatpush.msra.mxu0 %v170
  %239 = vmatmul.f32.gmra.mxu0 %v181
  %v240 = vpop.f32.mrf.mxu0
  %v241 = vadd.f32 %v221, %v240
  %242 = vdwg.mxu0
  %244 = vrot.lane.b32.xlu0 %v241, 96
  %v245 = vpop.permute.xlu0 %244
  %v247 = vmax.f32 %v241, %v245
  %248 = vrot.lane.b32.xlu0 %v241, 64
  %v249 = vpop.permute.xlu0 %248
  %v251 = vmax.f32 %v247, %v249
  %v252 = vsub.f32 %v241, %v251
  %v253 = vmul.f32 %v252, 1.442695
  %v254 = vpow.pop %v253
  %256 = vrot.lane.b32.xlu0 %v251, 32
  %v257 = vpop.permute.xlu0 %256
  %v259 = vsub.f32 %v241, %v257
  %v260 = vmul.f32 %v259, 1.442695
  %v261 = vpow.pop %v260
  %262 = vrot.lane.b32.xlu0 %v251, 64
  %v263 = vpop.permute.xlu0 %262
  %v265 = vsub.f32 %v241, %v263
  %v266 = vmul.f32 %v265, 1.442695
  %v267 = vpow.pop %v266
  %269 = vrot.lane.b32.xlu0 %v261, 96
  %v270 = vpop.permute.xlu0 %269
  %v272 = vadd.f32 %v254, %v270
  %274 = vrot.lane.b32.xlu0 %v267, 64
  %v275 = vpop.permute.xlu0 %274
  %v277 = vadd.f32 %v272, %v275
  %v278 = vrcp.pop %v277
  %v279 = vmul.f32 %v277, %v278
  %v280 = vsub.f32 1.0, %v279
  %v281 = vmul.f32 %v278, %v280
  %v282 = vadd.f32 %v278, %v281
  %vm283 = vweird.f32 %v277
  %vm284 = vweird.f32 %v278
  %vm285 = vmor %vm283, %vm284
  %v286 = vsel %vm285, %v278, %v282
  %v287 = vand.u32 2147483647, %v277
  %vm288 = vcmp.eq.f32.partialorder %v287, 8.507059e+37
  %v289 = vand.u32 %v277, 2147483648
  %v290 = vor.u32 1.1754944e-38, %v289
  %v291 = vsel %vm288, %v290, %v286
  %v292 = vmul.f32 1.0, %v291
  %v293 = vmul.f32 %v254, %v292
  %295 = vrot.lane.b32.xlu0 %v292, 32
  %v296 = vpop.permute.xlu0 %295
  %v298 = vmul.f32 %v261, %v296
  %299 = vrot.lane.b32.xlu0 %v292, 64
  %v300 = vpop.permute.xlu0 %299
  %v302 = vmul.f32 %v267, %v300
  %vm303 = vcmask 261120
  %v304 = vsel %vm303, %v293, %v298
  %v305 = vsel %vm179, %v304, %v302
  %vm306 = vcmask 785408
  %307 = vst.msk [vmem:[%s4] sm:$0xff] %vm306, %v305
  // Predicated region
  $region18: #{net_forward.1} parent=0 // pred_check
    _
  $region19: #{net_forward.1} parent=0 // pred_check_branch
    %309 = sbr.rel (0) target = $region21
  $region20: #{net_forward.1} parent=0 // pred_region
    _
  $region21: #{net_forward.1} parent=0 // pred_fallthru
    _
  // Predicated region
  $region22: #{net_forward.1} parent=0 // pred_check
    _
  $region23: #{net_forward.1} parent=0 // pred_check_branch
    %311 = sbr.rel (0) target = $region25
  $region24: #{net_forward.1} parent=0 // pred_region
    _
  $region25: #{net_forward.1} parent=0 // pred_fallthru
    _

</llo_original>
